<compile_context>
chip_gen: v7x
topology: tpu7x:2x2x1
jax: 0.10.0
libtpu: 0.0.40
codegen_flags: <defaults>
</compile_context>

<pallas_src>
import jax
import jax.numpy as jnp
from jax.experimental import pallas as pl
from jax.experimental.pallas import tpu as pltpu


def _round_up(x, m):
    return ((x + m - 1) // m) * m


def controlnet_kernel(d_ref, w1_ref, b1_ref, w2_ref, b2_ref, w3_ref, b3_ref,
                      o_ref):
    # d_ref: [F, Bt] transposed data tile; row 1 is the network input column.
    x = d_ref[1:2, :]                                        # [1, Bt]

    # layer1 + ReLU: in_features == 1, so this is a broadcast outer product on
    # the VPU ([H,1] * [1,Bt]) — avoids a full MXU fill/drain for a K=1 dot.
    h1 = jnp.maximum(w1_ref[...] * x + b1_ref[...], 0.0)     # [H, Bt]

    # layer2 + ReLU (MXU, f32 accumulate). Kept in f32 to match the 1e-5
    # reference tolerance (bf16 weights would be a v6e-only micro-win).
    h2 = jnp.dot(w2_ref[...], h1, preferred_element_type=jnp.float32)
    h2 = jnp.maximum(h2 + b2_ref[...], 0.0)                  # [H, Bt]

    # layer3 (no activation)
    out = jnp.dot(w3_ref[...], h2, preferred_element_type=jnp.float32)
    out = out + b3_ref[...]                                  # [O, Bt]

    # Gate by the input column; store is lane-dense over the batch axis.
    o_ref[...] = out * x


def controlnet_forward(data, params, *, block_b=512):
    """data: [B, F] (F >= 2). Returns [B, n_output] float32."""
    w1, b1, w2, b2, w3, b3 = params     # torch layout: W[out,in], b[out,1]
    B, F = data.shape
    H = w1.shape[0]
    O = w3.shape[0]

    # Put the batch on the lane axis: [F, B]. (Pure layout plumbing; the
    # column slice itself happens inside the kernel.)
    data_t = jnp.transpose(data).astype(jnp.float32)

    # Batch tile: multiple of 128 (lane width); pad B to a whole number of
    # tiles so the final tile is fully valid.
    bt = min(block_b, _round_up(max(B, 1), 128))
    b_pad = _round_up(B, bt)
    if b_pad != B:
        data_t = jnp.pad(data_t, ((0, 0), (0, b_pad - B)))
    grid = (b_pad // bt,)

    resident = lambda i: (0, 0)         # weights/biases stay VMEM-resident
    flops = 2 * b_pad * (H + H * H + O * H) + 4 * b_pad * (2 * H + O)
    bytes_accessed = 4 * (F * b_pad + O * b_pad
                          + H * 1 + H + H * H + H + O * H + O)

    out_t = pl.pallas_call(
        controlnet_kernel,
        out_shape=jax.ShapeDtypeStruct((O, b_pad), jnp.float32),
        grid_spec=pltpu.PrefetchScalarGridSpec(
            num_scalar_prefetch=0,
            grid=grid,
            in_specs=[
                pl.BlockSpec((F, bt), lambda i: (0, i)),   # data (transposed)
                pl.BlockSpec((H, 1), resident),            # W1
                pl.BlockSpec((H, 1), resident),            # b1
                pl.BlockSpec((H, H), resident),            # W2
                pl.BlockSpec((H, 1), resident),            # b2
                pl.BlockSpec((O, H), resident),            # W3
                pl.BlockSpec((O, 1), resident),            # b3
            ],
            out_specs=pl.BlockSpec((O, bt), lambda i: (0, i)),
        ),
        compiler_params=pltpu.CompilerParams(
            dimension_semantics=("parallel",)),
        cost_estimate=pl.CostEstimate(
            flops=flops, transcendentals=0, bytes_accessed=bytes_accessed),
    )(data_t, w1, b1, w2, b2, w3, b3)

    # Back to the module's [B, n_output] layout; drop batch padding.
    return jnp.transpose(out_t[:, :B])


def init_params(key, n_input, n_hidden, n_output):
    """Deterministic synthetic parameters (PyTorch-Linear-like uniform init).

    Weights stored as [out_features, in_features]; biases as [out, 1]."""
    ks = jax.random.split(key, 6)

    def lin(kw, kb, fan_in, fan_out):
        bound = 1.0 / jnp.sqrt(jnp.float32(fan_in))
        w = jax.random.uniform(kw, (fan_out, fan_in), jnp.float32,
                               minval=-bound, maxval=bound)
        b = jax.random.uniform(kb, (fan_out, 1), jnp.float32,
                               minval=-bound, maxval=bound)
        return w, b

    w1, b1 = lin(ks[0], ks[1], n_input, n_hidden)
    w2, b2 = lin(ks[2], ks[3], n_hidden, n_hidden)
    w3, b3 = lin(ks[4], ks[5], n_hidden, n_output)
    return (w1, b1, w2, b2, w3, b3)


if __name__ == "__main__":
    key = jax.random.PRNGKey(0)
    k_data, k_param = jax.random.split(key)

    # Shapes implied by the forward pass: data[:, 1:2] feeds layer1, so
    # n_input must be 1. Use batch=8, features-in-data=8, hidden=32, out=4.
    B, F, n_input, n_hidden, n_output = 8, 8, 1, 32, 4

    data = jax.random.normal(k_data, (B, F), dtype=jnp.float32)
    params = init_params(k_param, n_input, n_hidden, n_output)

    out = jax.block_until_ready(controlnet_forward(data, params))

    # Sanity check vs. plain-JAX reference of the same math (torch layout).
    w1, b1, w2, b2, w3, b3 = params
    x = data[:, 1:2]
    h1 = jnp.maximum(x @ w1.T + b1.T, 0.0)
    h2 = jnp.maximum(h1 @ w2.T + b2.T, 0.0)
    ref = (h2 @ w3.T + b3.T) * x
    assert out.shape == (B, n_output)
    assert jnp.allclose(out, ref, atol=1e-5, rtol=1e-5)

    print("KERNEL_OK")
</pallas_src>

<mosaic_0001>
module attributes {stable_mosaic.version = 11 : i64} {
  func.func @controlnet_kernel(%arg0: i32, %arg1: memref<8x128xf32, #tpu.memory_space<vmem>>, %arg2: memref<32x1xf32, #tpu.memory_space<vmem>>, %arg3: memref<32x1xf32, #tpu.memory_space<vmem>>, %arg4: memref<32x32xf32, #tpu.memory_space<vmem>>, %arg5: memref<32x1xf32, #tpu.memory_space<vmem>>, %arg6: memref<4x32xf32, #tpu.memory_space<vmem>>, %arg7: memref<4x1xf32, #tpu.memory_space<vmem>>, %arg8: memref<4x128xf32, #tpu.memory_space<vmem>>) attributes {dimension_semantics = [#tpu.dimension_semantics<parallel>], iteration_bounds = array<i64: 1>, scalar_prefetch = 0 : i64, scratch_operands = 0 : i64, tpu.core_type = #tpu.core_type<tc>, window_params = [{transform_indices = @transform_0, window_bounds = array<i64: 8, 128>}, {pipeline_mode = #tpu.pipeline_mode<synchronous>, transform_indices = @transform_1, window_bounds = array<i64: 32, 1>}, {pipeline_mode = #tpu.pipeline_mode<synchronous>, transform_indices = @transform_2, window_bounds = array<i64: 32, 1>}, {pipeline_mode = #tpu.pipeline_mode<synchronous>, transform_indices = @transform_3, window_bounds = array<i64: 32, 32>}, {pipeline_mode = #tpu.pipeline_mode<synchronous>, transform_indices = @transform_4, window_bounds = array<i64: 32, 1>}, {pipeline_mode = #tpu.pipeline_mode<synchronous>, transform_indices = @transform_5, window_bounds = array<i64: 4, 32>}, {pipeline_mode = #tpu.pipeline_mode<synchronous>, transform_indices = @transform_6, window_bounds = array<i64: 4, 1>}, {transform_indices = @transform_7, window_bounds = array<i64: 4, 128>}]} {
    %c1 = arith.constant 1 : index
    %c0 = arith.constant 0 : index
    %0 = vector.load %arg1[%c1, %c0] : memref<8x128xf32, #tpu.memory_space<vmem>>, vector<1x128xf32>
    %c0_0 = arith.constant 0 : index
    %c0_1 = arith.constant 0 : index
    %1 = vector.load %arg2[%c0_0, %c0_1] : memref<32x1xf32, #tpu.memory_space<vmem>>, vector<32x1xf32>
    %2 = vector.broadcast %1 : vector<32x1xf32> to vector<32x128xf32>
    %3 = vector.broadcast %0 : vector<1x128xf32> to vector<32x128xf32>
    %4 = arith.mulf %2, %3 : vector<32x128xf32>
    %c0_2 = arith.constant 0 : index
    %c0_3 = arith.constant 0 : index
    %5 = vector.load %arg3[%c0_2, %c0_3] : memref<32x1xf32, #tpu.memory_space<vmem>>, vector<32x1xf32>
    %6 = vector.broadcast %5 : vector<32x1xf32> to vector<32x128xf32>
    %7 = arith.addf %4, %6 : vector<32x128xf32>
    %cst = arith.constant 0.000000e+00 : f32
    %8 = vector.broadcast %cst : f32 to vector<32x128xf32>
    %9 = arith.maximumf %7, %8 : vector<32x128xf32>
    %c0_4 = arith.constant 0 : index
    %c0_5 = arith.constant 0 : index
    %10 = vector.load %arg4[%c0_4, %c0_5] : memref<32x32xf32, #tpu.memory_space<vmem>>, vector<32x32xf32>
    %cst_6 = arith.constant dense<0.000000e+00> : vector<32x128xf32>
    %11 = tpu.matmul %10, %9, %cst_6 {dimension_numbers = #tpu.dot_dimension_numbers<[1], [0], [0], [1], [0, 0, 1, 1], [], []>} : vector<32x32xf32>, vector<32x128xf32>, vector<32x128xf32> -> vector<32x128xf32>
    %c0_7 = arith.constant 0 : index
    %c0_8 = arith.constant 0 : index
    %12 = vector.load %arg5[%c0_7, %c0_8] : memref<32x1xf32, #tpu.memory_space<vmem>>, vector<32x1xf32>
    %13 = vector.broadcast %12 : vector<32x1xf32> to vector<32x128xf32>
    %14 = arith.addf %11, %13 : vector<32x128xf32>
    %cst_9 = arith.constant 0.000000e+00 : f32
    %15 = vector.broadcast %cst_9 : f32 to vector<32x128xf32>
    %16 = arith.maximumf %14, %15 : vector<32x128xf32>
    %c0_10 = arith.constant 0 : index
    %c0_11 = arith.constant 0 : index
    %17 = vector.load %arg6[%c0_10, %c0_11] : memref<4x32xf32, #tpu.memory_space<vmem>>, vector<4x32xf32>
    %cst_12 = arith.constant dense<0.000000e+00> : vector<4x128xf32>
    %18 = tpu.matmul %17, %16, %cst_12 {dimension_numbers = #tpu.dot_dimension_numbers<[1], [0], [0], [1], [0, 0, 1, 1], [], []>} : vector<4x32xf32>, vector<32x128xf32>, vector<4x128xf32> -> vector<4x128xf32>
    %c0_13 = arith.constant 0 : index
    %c0_14 = arith.constant 0 : index
    %19 = vector.load %arg7[%c0_13, %c0_14] : memref<4x1xf32, #tpu.memory_space<vmem>>, vector<4x1xf32>
    %20 = vector.broadcast %19 : vector<4x1xf32> to vector<4x128xf32>
    %21 = arith.addf %18, %20 : vector<4x128xf32>
    %22 = vector.broadcast %0 : vector<1x128xf32> to vector<4x128xf32>
    %23 = arith.mulf %21, %22 : vector<4x128xf32>
    %c0_15 = arith.constant 0 : index
    %c0_16 = arith.constant 0 : index
    %24 = vector.load %arg8[%c0_15, %c0_16] : memref<4x128xf32, #tpu.memory_space<vmem>>, vector<4x128xf32>
    tpu.vector_store %arg8[%c0_15, %c0_16], %23 {strides = array<i32>} : memref<4x128xf32, #tpu.memory_space<vmem>>, vector<4x128xf32>,
    return
  }
  func.func @transform_0(%arg0: i32) -> (i32, i32) {
    %c0_i32 = arith.constant 0 : i32
    %c0_i32_0 = arith.constant 0 : i32
    return %c0_i32, %arg0 : i32, i32
  }
  func.func @transform_1(%arg0: i32) -> (i32, i32) {
    %c0_i32 = arith.constant 0 : i32
    %c0_i32_0 = arith.constant 0 : i32
    %c0_i32_1 = arith.constant 0 : i32
    return %c0_i32, %c0_i32_0 : i32, i32
  }
  func.func @transform_2(%arg0: i32) -> (i32, i32) {
    %c0_i32 = arith.constant 0 : i32
    %c0_i32_0 = arith.constant 0 : i32
    %c0_i32_1 = arith.constant 0 : i32
    return %c0_i32, %c0_i32_0 : i32, i32
  }
  func.func @transform_3(%arg0: i32) -> (i32, i32) {
    %c0_i32 = arith.constant 0 : i32
    %c0_i32_0 = arith.constant 0 : i32
    %c0_i32_1 = arith.constant 0 : i32
    return %c0_i32, %c0_i32_0 : i32, i32
  }
  func.func @transform_4(%arg0: i32) -> (i32, i32) {
    %c0_i32 = arith.constant 0 : i32
    %c0_i32_0 = arith.constant 0 : i32
    %c0_i32_1 = arith.constant 0 : i32
    return %c0_i32, %c0_i32_0 : i32, i32
  }
  func.func @transform_5(%arg0: i32) -> (i32, i32) {
    %c0_i32 = arith.constant 0 : i32
    %c0_i32_0 = arith.constant 0 : i32
    %c0_i32_1 = arith.constant 0 : i32
    return %c0_i32, %c0_i32_0 : i32, i32
  }
  func.func @transform_6(%arg0: i32) -> (i32, i32) {
    %c0_i32 = arith.constant 0 : i32
    %c0_i32_0 = arith.constant 0 : i32
    %c0_i32_1 = arith.constant 0 : i32
    return %c0_i32, %c0_i32_0 : i32, i32
  }
  func.func @transform_7(%arg0: i32) -> (i32, i32) {
    %c0_i32 = arith.constant 0 : i32
    %c0_i32_0 = arith.constant 0 : i32
    return %c0_i32, %arg0 : i32, i32
  }
}

</mosaic_0001>

<llo_original>
// kernel: tpu_custom_call.1
$region0: #{tpu_custom_call.1}
  #allocation0 [shape = 'u32[]', space=smem, size = 0x4, offset = 0x4, fixed_abs, tag = 'smem constant byte address 0x4 - core index']
  #allocation1 [shape = 'u32[144,128]{1,0:T(1,128)}', space=vmem, size = 0x12000, scoped, tag = 'internal scratch']
  %s0 = inlined_call_operand.vmem [shape: f32[8,128], index: 0, kind: input, shape index: {}]
  %s1 = inlined_call_operand.vmem [shape: f32[32,1], index: 1, kind: input, shape index: {}]
  %s2 = inlined_call_operand.vmem [shape: f32[32,1], index: 2, kind: input, shape index: {}]
  %s3 = inlined_call_operand.vmem [shape: f32[32,32], index: 3, kind: input, shape index: {}]
  %s4 = inlined_call_operand.vmem [shape: f32[32,1], index: 4, kind: input, shape index: {}]
  %s5 = inlined_call_operand.vmem [shape: f32[4,32], index: 5, kind: input, shape index: {}]
  %s6 = inlined_call_operand.vmem [shape: f32[4,1], index: 6, kind: input, shape index: {}]
  %s7 = inlined_call_operand.hbm [shape: f32[4,128], index: 7, kind: output, shape index: {}]
  %s8 = sld [smem:[#allocation0]]
  $region38: #{tpu_custom_call.1} parent=0
    _
  %s10 = ssub.s32 1, %s8
  %s11 = scalar_select 0, %s10, %s8
  $region1: #{tpu_custom_call.1} parent=0
    #allocation2 [shape = 'u8[2048]{0}', space=vmem, size = 0x800, scoped, tag = 'output window, operand 0, single buffered']
    #allocation3 [shape = 's32[1]{0}', space=sflag, size = 0x4, scoped, tag = 'scoped memory for tpu_custom_call.1']
    %12 = vsyncpa [#allocation3], 0
    // Predicated region
    $region2: #{tpu_custom_call.1} parent=1 // pred_check
      _
    $region3: #{tpu_custom_call.1} parent=1 // pred_check_branch
      %14 = sbr.rel (0) target = $region5
    $region4: #{tpu_custom_call.1} parent=1 // pred_region
      _
    $region5: #{tpu_custom_call.1} parent=1 // pred_fallthru
      _
    // Predicated region
    $region6: #{tpu_custom_call.1} parent=1 // pred_check
      _
    $region7: #{tpu_custom_call.1} parent=1 // pred_check_branch
      %16 = sbr.rel (0) target = $region9
    $region8: #{tpu_custom_call.1} parent=1 // pred_region
      _
    $region9: #{tpu_custom_call.1} parent=1 // pred_fallthru
      _
    // Predicated region
    $region10: #{tpu_custom_call.1} parent=1 // pred_check
      _
    $region11: #{tpu_custom_call.1} parent=1 // pred_check_branch
      %18 = sbr.rel (0) target = $region13
    $region12: #{tpu_custom_call.1} parent=1 // pred_region
      _
    $region13: #{tpu_custom_call.1} parent=1 // pred_fallthru
      _
    // Predicated region
    $region14: #{tpu_custom_call.1} parent=1 // pred_check
      _
    $region15: #{tpu_custom_call.1} parent=1 // pred_check_branch
      %20 = sbr.rel (0) target = $region17
    $region16: #{tpu_custom_call.1} parent=1 // pred_region
      _
    $region17: #{tpu_custom_call.1} parent=1 // pred_fallthru
      _
    // Predicated region
    $region18: #{tpu_custom_call.1} parent=1 // pred_check
      _
    $region19: #{tpu_custom_call.1} parent=1 // pred_check_branch
      %22 = sbr.rel (0) target = $region21
    $region20: #{tpu_custom_call.1} parent=1 // pred_region
      _
    $region21: #{tpu_custom_call.1} parent=1 // pred_fallthru
      _
    // Predicated region
    $region22: #{tpu_custom_call.1} parent=1 // pred_check
      _
    $region23: #{tpu_custom_call.1} parent=1 // pred_check_branch
      %24 = sbr.rel (0) target = $region25
    $region24: #{tpu_custom_call.1} parent=1 // pred_region
      _
    $region25: #{tpu_custom_call.1} parent=1 // pred_fallthru
      _
    // Predicated region
    $region26: #{tpu_custom_call.1} parent=1 // pred_check
      _
    $region27: #{tpu_custom_call.1} parent=1 // pred_check_branch
      %26 = sbr.rel (0) target = $region29
    $region28: #{tpu_custom_call.1} parent=1 // pred_region
      _
    $region29: #{tpu_custom_call.1} parent=1 // pred_fallthru
      _
    %v27 = vld [vmem:[%s0 + $0x1] sm:$0x1]
    %v28 = vld [vmem:[%s1] sm:$0xff]
    %v29 = vld [vmem:[%s1 + $0x8] sm:$0xff]
    %v30 = vld [vmem:[%s1 + $0x10] sm:$0xff]
    %v31 = vld [vmem:[%s1 + $0x18] sm:$0xff]
    %33 = vset.pattern.permute.xlu0 0
    %34 = vperm.xlu0 %33, %v28
    %v35 = vpop.permute.xlu0 %34
    %38 = vset.pattern.permute.xlu0 0
    %39 = vperm.xlu0 %38, %v29
    %v40 = vpop.permute.xlu0 %39
    %43 = vset.pattern.permute.xlu0 0
    %44 = vperm.xlu0 %43, %v30
    %v45 = vpop.permute.xlu0 %44
    %48 = vset.pattern.permute.xlu0 0
    %49 = vperm.xlu0 %48, %v31
    %v50 = vpop.permute.xlu0 %49
    %v52 = vlaneseq
    %v53 = vshrl.u32 %v52, 7
    %v54 = vsub.s32 0, %v53
    %v55 = vrot.slane %v27, %v54
    %v56 = vmul.f32 %v35, %v55
    %v57 = vmul.f32 %v40, %v55
    %v58 = vmul.f32 %v45, %v55
    %v59 = vmul.f32 %v50, %v55
    %v60 = vld [vmem:[%s2] sm:$0xff]
    %v61 = vld [vmem:[%s2 + $0x8] sm:$0xff]
    %v62 = vld [vmem:[%s2 + $0x10] sm:$0xff]
    %v63 = vld [vmem:[%s2 + $0x18] sm:$0xff]
    %65 = vset.pattern.permute.xlu0 0
    %66 = vperm.xlu0 %65, %v60
    %v67 = vpop.permute.xlu0 %66
    %70 = vset.pattern.permute.xlu0 0
    %71 = vperm.xlu0 %70, %v61
    %v72 = vpop.permute.xlu0 %71
    %75 = vset.pattern.permute.xlu0 0
    %76 = vperm.xlu0 %75, %v62
    %v77 = vpop.permute.xlu0 %76
    %80 = vset.pattern.permute.xlu0 0
    %81 = vperm.xlu0 %80, %v63
    %v82 = vpop.permute.xlu0 %81
    %v84 = vadd.f32 %v56, %v67
    %v85 = vadd.f32 %v57, %v72
    %v86 = vadd.f32 %v58, %v77
    %v87 = vadd.f32 %v59, %v82
    %v88 = vmax.f32 %v84, 0.0
    %v89 = vmax.f32 %v85, 0.0
    %v90 = vmax.f32 %v86, 0.0
    %v91 = vmax.f32 %v87, 0.0
    %v92 = vld [vmem:[%s3] sm:$0xff]
    %v93 = vld [vmem:[%s3 + $0x8] sm:$0xff]
    %v94 = vld [vmem:[%s3 + $0x10] sm:$0xff]
    %v95 = vld [vmem:[%s3 + $0x18] sm:$0xff]
    %v96 = vld [vmem:[%s4] sm:$0xff]
    %v97 = vld [vmem:[%s4 + $0x8] sm:$0xff]
    %v98 = vld [vmem:[%s4 + $0x10] sm:$0xff]
    %v99 = vld [vmem:[%s4 + $0x18] sm:$0xff]
    %101 = vset.pattern.permute.xlu0 0
    %102 = vperm.xlu0 %101, %v96
    %v103 = vpop.permute.xlu0 %102
    %106 = vset.pattern.permute.xlu0 0
    %107 = vperm.xlu0 %106, %v97
    %v108 = vpop.permute.xlu0 %107
    %111 = vset.pattern.permute.xlu0 0
    %112 = vperm.xlu0 %111, %v98
    %v113 = vpop.permute.xlu0 %112
    %116 = vset.pattern.permute.xlu0 0
    %117 = vperm.xlu0 %116, %v99
    %v118 = vpop.permute.xlu0 %117
    %vm120 = vcmask 261120
    %v122 = vsel %vm120, %v92, 0
    %v125 = vsel %vm120, %v93, 0
    %v128 = vsel %vm120, %v94, 0
    %v131 = vsel %vm120, %v95, 0
    %133 = vmatprep.subr.mxu0 0.0
    %134 = vmatpush1.msra.mxu0 %v88
    %135 = vmatprep.subr.mxu0 0.0
    %136 = vmatpush1.msra.mxu0 %v89
    %137 = vmatprep.subr.mxu0 0.0
    %138 = vmatpush1.msra.mxu0 %v90
    %139 = vmatprep.subr.mxu0 0.0
    %140 = vmatpush1.msra.mxu0 %v91
    %141 = vmatprep.subr.mxu0 0.0
    %142 = vmatpush1.msra.mxu0 0.0
    %143 = vmatprep.subr.mxu0 0.0
    %144 = vmatpush1.msra.mxu0 0.0
    %145 = vmatprep.subr.mxu0 0.0
    %146 = vmatpush1.msra.mxu0 0.0
    %147 = vmatprep.subr.mxu0 0.0
    %148 = vmatpush1.msra.mxu0 0.0
    %149 = vmatprep.subr.mxu0 0.0
    %150 = vmatpush1.msra.mxu0 0.0
    %151 = vmatprep.subr.mxu0 0.0
    %152 = vmatpush1.msra.mxu0 0.0
    %153 = vmatprep.subr.mxu0 0.0
    %154 = vmatpush1.msra.mxu0 0.0
    %155 = vmatprep.subr.mxu0 0.0
    %156 = vmatpush1.msra.mxu0 0.0
    %157 = vmatprep.subr.mxu0 0.0
    %158 = vmatpush1.msra.mxu0 0.0
    %159 = vmatprep.subr.mxu0 0.0
    %160 = vmatpush1.msra.mxu0 0.0
    %161 = vmatprep.subr.mxu0 0.0
    %162 = vmatpush1.msra.mxu0 0.0
    %163 = vmatprep.subr.mxu0 0.0
    %164 = vmatpush1.msra.mxu0 0.0
    %165 = vmatprep.subr.mxu0 0.0
    %166 = vmatpush1.msra.mxu0 0.0
    %167 = vmatprep.subr.mxu0 0.0
    %168 = vmatpush1.msra.mxu0 0.0
    %169 = vmatprep.subr.mxu0 0.0
    %170 = vmatpush1.msra.mxu0 0.0
    %171 = vmatprep.subr.mxu0 0.0
    %172 = vmatpush1.msra.mxu0 0.0
    %173 = vmatprep.subr.mxu0 0.0
    %174 = vmatpush1.msra.mxu0 0.0
    %175 = vmatprep.subr.mxu0 0.0
    %176 = vmatpush1.msra.mxu0 0.0
    %177 = vmatprep.subr.mxu0 0.0
    %178 = vmatpush1.msra.mxu0 0.0
    %179 = vmatprep.subr.mxu0 0.0
    %180 = vmatpush1.msra.mxu0 0.0
    %181 = vmatprep.subr.mxu0 0.0
    %182 = vmatpush1.msra.mxu0 0.0
    %183 = vmatprep.subr.mxu0 0.0
    %184 = vmatpush1.msra.mxu0 0.0
    %185 = vmatprep.subr.mxu0 0.0
    %186 = vmatpush1.msra.mxu0 0.0
    %187 = vmatprep.subr.mxu0 0.0
    %188 = vmatpush1.msra.mxu0 0.0
    %189 = vmatprep.subr.mxu0 0.0
    %190 = vmatpush1.msra.mxu0 0.0
    %191 = vmatprep.subr.mxu0 0.0
    %192 = vmatpush1.msra.mxu0 0.0
    %193 = vmatprep.subr.mxu0 0.0
    %194 = vmatpush1.msra.mxu0 0.0
    %195 = vmatprep.subr.mxu0 0.0
    %196 = vmatpush1.msra.mxu0 0.0
    %197 = vmatprep.mubr.f32.mxu0 0.0
    %198 = vmatmul.mubr.f32.gmra.mrb[0].mxu0 %v122
    %v199 = vpop.f32.mrb[0].mxu0
    %v200 = vadd.f32 %v103, %v199
    %v201 = vpop.f32.mrb[0].mxu0
    %202 = vmatprep.mubr.f32.mxu0 0.0
    %203 = vmatmul.mubr.f32.gmra.mrb[0].mxu0 %v125
    %v204 = vpop.f32.mrb[0].mxu0
    %v205 = vadd.f32 %v108, %v204
    %v206 = vpop.f32.mrb[0].mxu0
    %207 = vmatprep.mubr.f32.mxu0 0.0
    %208 = vmatmul.mubr.f32.gmra.mrb[0].mxu0 %v128
    %v209 = vpop.f32.mrb[0].mxu0
    %v210 = vadd.f32 %v113, %v209
    %v211 = vpop.f32.mrb[0].mxu0
    %212 = vmatprep.mubr.f32.mxu0 0.0
    %213 = vmatmul.mubr.f32.gmra.mrb[0].mxu0 %v131
    %v214 = vpop.f32.mrb[0].mxu0
    %v215 = vadd.f32 %v118, %v214
    %v216 = vpop.f32.mrb[0].mxu0
    %217 = vdwg.mxu0
    %v218 = vmax.f32 %v200, 0.0
    %v219 = vmax.f32 %v205, 0.0
    %v220 = vmax.f32 %v210, 0.0
    %v221 = vmax.f32 %v215, 0.0
    %v222 = vld [vmem:[%s5] sm:$0xf]
    %v223 = vld [vmem:[%s6] sm:$0xf]
    %225 = vset.pattern.permute.xlu0 0
    %226 = vperm.xlu0 %225, %v223
    %v227 = vpop.permute.xlu0 %226
    %v230 = vsel %vm120, %v222, 0
    %232 = vmatprep.subr.mxu0 0.0
    %233 = vmatpush1.msra.mxu0 %v218
    %234 = vmatprep.subr.mxu0 0.0
    %235 = vmatpush1.msra.mxu0 %v219
    %236 = vmatprep.subr.mxu0 0.0
    %237 = vmatpush1.msra.mxu0 %v220
    %238 = vmatprep.subr.mxu0 0.0
    %239 = vmatpush1.msra.mxu0 %v221
    %240 = vmatprep.subr.mxu0 0.0
    %241 = vmatpush1.msra.mxu0 0.0
    %242 = vmatprep.subr.mxu0 0.0
    %243 = vmatpush1.msra.mxu0 0.0
    %244 = vmatprep.subr.mxu0 0.0
    %245 = vmatpush1.msra.mxu0 0.0
    %246 = vmatprep.subr.mxu0 0.0
    %247 = vmatpush1.msra.mxu0 0.0
    %248 = vmatprep.subr.mxu0 0.0
    %249 = vmatpush1.msra.mxu0 0.0
    %250 = vmatprep.subr.mxu0 0.0
    %251 = vmatpush1.msra.mxu0 0.0
    %252 = vmatprep.subr.mxu0 0.0
    %253 = vmatpush1.msra.mxu0 0.0
    %254 = vmatprep.subr.mxu0 0.0
    %255 = vmatpush1.msra.mxu0 0.0
    %256 = vmatprep.subr.mxu0 0.0
    %257 = vmatpush1.msra.mxu0 0.0
    %258 = vmatprep.subr.mxu0 0.0
    %259 = vmatpush1.msra.mxu0 0.0
    %260 = vmatprep.subr.mxu0 0.0
    %261 = vmatpush1.msra.mxu0 0.0
    %262 = vmatprep.subr.mxu0 0.0
    %263 = vmatpush1.msra.mxu0 0.0
    %264 = vmatprep.subr.mxu0 0.0
    %265 = vmatpush1.msra.mxu0 0.0
    %266 = vmatprep.subr.mxu0 0.0
    %267 = vmatpush1.msra.mxu0 0.0
    %268 = vmatprep.subr.mxu0 0.0
    %269 = vmatpush1.msra.mxu0 0.0
    %270 = vmatprep.subr.mxu0 0.0
    %271 = vmatpush1.msra.mxu0 0.0
    %272 = vmatprep.subr.mxu0 0.0
    %273 = vmatpush1.msra.mxu0 0.0
    %274 = vmatprep.subr.mxu0 0.0
    %275 = vmatpush1.msra.mxu0 0.0
    %276 = vmatprep.subr.mxu0 0.0
    %277 = vmatpush1.msra.mxu0 0.0
    %278 = vmatprep.subr.mxu0 0.0
    %279 = vmatpush1.msra.mxu0 0.0
    %280 = vmatprep.subr.mxu0 0.0
    %281 = vmatpush1.msra.mxu0 0.0
    %282 = vmatprep.subr.mxu0 0.0
    %283 = vmatpush1.msra.mxu0 0.0
    %284 = vmatprep.subr.mxu0 0.0
    %285 = vmatpush1.msra.mxu0 0.0
    %286 = vmatprep.subr.mxu0 0.0
    %287 = vmatpush1.msra.mxu0 0.0
    %288 = vmatprep.subr.mxu0 0.0
    %289 = vmatpush1.msra.mxu0 0.0
    %290 = vmatprep.subr.mxu0 0.0
    %291 = vmatpush1.msra.mxu0 0.0
    %292 = vmatprep.subr.mxu0 0.0
    %293 = vmatpush1.msra.mxu0 0.0
    %294 = vmatprep.subr.mxu0 0.0
    %295 = vmatpush1.msra.mxu0 0.0
    %296 = vmatprep.mubr.f32.mxu0 0.0
    %297 = vmatmul.mubr.f32.gmra.mrb[0].mxu0 %v230
    %v298 = vpop.f32.mrb[0].mxu0
    %v299 = vadd.f32 %v227, %v298
    %v300 = vpop.f32.mrb[0].mxu0
    %301 = vdwg.mxu0
    %v302 = vmul.f32 %v299, %v55
    %303 = vst [vmem:[#allocation2] sm:$0xf] %v302
    // Predicated region
    $region30: #{tpu_custom_call.1} parent=1 // pred_check
      _
    $region31: #{tpu_custom_call.1} parent=1 // pred_check_branch
      %305 = sbr.rel (0) target = $region33
    $region32: #{tpu_custom_call.1} parent=1 // pred_region
      %s307 = ssub.s32 64, 64
      %308 = vsyncadd [#allocation3], %s307
      %s310 = sshll.u32 [#allocation2], 4
      %s311 = int_to_ptr.vmem [resolvable:$true] %s310
      %313 = dma.vmem_to_hbm [thread:$0]  %s311, 64, %s7, [#allocation3]
    $region33: #{tpu_custom_call.1} parent=1 // pred_fallthru
      _
    // Predicated region
    $region34: #{tpu_custom_call.1} parent=1 // pred_check
      _
    $region35: #{tpu_custom_call.1} parent=1 // pred_check_branch
      %315 = sbr.rel (0) target = $region37
    $region36: #{tpu_custom_call.1} parent=1 // pred_region
      %316 = dma.done [#allocation3], 64
    $region37: #{tpu_custom_call.1} parent=1 // pred_fallthru
      _
    %317 = vsyncpa [#allocation3], 1

</llo_original>
